<compile_context>
chip_gen: v7x
topology: tpu7x:2x2x1
jax: 0.10.0
libtpu: 0.0.40
codegen_flags: <defaults>
</compile_context>

<pallas_src>
import functools

import jax
import jax.numpy as jnp
from jax import lax
from jax.experimental import pallas as pl
from jax.experimental.pallas import tpu as pltpu

LRELU_SLOPE = 0.1
PERIODS = (2, 3, 5, 7, 11)
COMPUTE_DTYPE = jnp.bfloat16

# (cin, cout, kernel, stride, groups, padding)
DISC_S_SPECS = [
    (1, 16, 15, 1, 1, 7),
    (16, 64, 41, 4, 4, 20),
    (64, 256, 41, 4, 16, 20),
    (256, 1024, 41, 4, 64, 20),
    (1024, 1024, 41, 4, 256, 20),
    (1024, 1024, 5, 1, 1, 2),
]
DISC_S_POST = (1024, 1, 3, 1, 1, 1)

DISC_P_SPECS = [
    (1, 32, 5, 3, 1, 2),
    (32, 128, 5, 3, 1, 2),
    (128, 512, 5, 3, 1, 2),
    (512, 1024, 5, 3, 1, 2),
    (1024, 1024, 5, 1, 1, 2),
]
DISC_P_POST = (1024, 1, 3, 1, 1, 1)


# ------------------------------ helpers ------------------------------------

def _round_up(a, m):
    return (a + m - 1) // m * m


def _pick_group_block(groups, cog):
    """Smallest divisor of `groups` whose packed output width is lane dense."""
    for d in range(1, groups + 1):
        if groups % d == 0 and d * cog >= 128 and (d * cog) % 128 == 0:
            return d
    return groups


@functools.lru_cache()
def _tiling_for_chip():
    """(max N tile rows, vmem_limit_bytes) derived from chip VMEM capacity."""
    try:
        vmem = pltpu.get_tpu_info().vmem_capacity_bytes
    except Exception:
        vmem = 64 * 1024 * 1024
    if vmem >= 96 * 1024 * 1024:            # v5e / v6e : 128 MiB VMEM
        return 2048, 80 * 1024 * 1024
    return 1024, 48 * 1024 * 1024           # v7x       : 64 MiB VMEM


# ----------------------------- Pallas kernel --------------------------------

def _conv_mm_kernel(x_ref, w_ref, b_ref, o_ref, *, apply_act, slope):
    """One (column-block, N-tile) step: a single lane-dense im2col matmul.

    x_ref: (n_tile, contr) bf16   w_ref: (contr, cout_b) bf16
    b_ref: (1, cout_b)     f32    o_ref: (n_tile, cout_b) f32
    """
    y = jnp.dot(x_ref[...], w_ref[...], preferred_element_type=jnp.float32)
    y = y + b_ref[...]
    if apply_act:
        y = jnp.where(y >= 0.0, y, slope * y)
    o_ref[...] = y


def conv1d_pallas(x, w, b, *, stride, padding, groups=1, apply_act=True):
    """Grouped 1-D convolution + optional leaky_relu (Pallas hot path).

    x: (Nb, T, Cin) f32    w: (Cout, Cin//groups, K)    b: (Cout,)
    returns (Nb, T_out, Cout) f32
    """
    Nb, T, Cin = x.shape
    Cout, Cig, K = w.shape
    G = groups
    Cog = Cout // G
    T_out = (T + 2 * padding - K) // stride + 1
    N = Nb * T_out

    grouped = G > 1
    if grouped:
        gb = _pick_group_block(G, Cog)      # groups packed per kernel step
        nblk = G // gb
        contr = gb * K * Cig
        cout_b = gb * Cog                   # >=128 or == Cout
    else:
        gb = 1
        cout_b = min(Cout, 256)             # multiple of 128 or full Cout
        nblk = Cout // cout_b
        contr = K * Cin

    n_tile_max, vmem_limit = _tiling_for_chip()
    n_tile = n_tile_max if N >= n_tile_max else _round_up(N, 8)
    n_pad = _round_up(N, n_tile)
    n_tiles = n_pad // n_tile

    # -------- glue: im2col in bf16 (time on sublanes, channels on lanes) ----
    # TODO(synk): build the K tap windows in-kernel from a VMEM-resident time
    # slab (manual DMA of the padded input) to remove the remaining K/stride
    # HBM blow-up of this materialized im2col matrix.
    xc = x.astype(COMPUTE_DTYPE)
    xp = jnp.pad(xc, ((0, 0), (padding, padding), (0, 0)))
    taps = [
        lax.slice(xp, (0, k, 0),
                  (Nb, k + (T_out - 1) * stride + 1, Cin),
                  (1, stride, 1))
        for k in range(K)
    ]
    xt = jnp.stack(taps, axis=0)                                 # (K,Nb,To,Cin)
    xt = xt.reshape(K, Nb, T_out, G, Cig).transpose(1, 2, 3, 0, 4)  # (Nb,To,G,K,Cig)
    if grouped:
        xcol = xt.reshape(N, nblk, contr).transpose(1, 0, 2)     # (nblk,N,contr)
    else:
        xcol = xt.reshape(1, N, contr)                           # (1,N,contr)
    if n_pad != N:
        xcol = jnp.pad(xcol, ((0, 0), (0, n_pad - N), (0, 0)))

    # -------- weights: (Cout, Cig, K) -> packed (nblk, contr, cout_b) -------
    wg = w.astype(COMPUTE_DTYPE).reshape(G, Cog, Cig, K).transpose(0, 3, 2, 1)
    if grouped:
        wb = wg.reshape(nblk, gb, K * Cig, Cog)
        eye = jnp.eye(gb, dtype=COMPUTE_DTYPE)
        wpack = jnp.einsum('bgko,gh->bgkho', wb, eye)            # block-diagonal
        wpack = wpack.reshape(nblk, contr, cout_b)
    else:
        w2 = wg.reshape(contr, Cout)                             # rows = (k, i)
        wpack = w2.reshape(contr, nblk, cout_b).transpose(1, 0, 2)
    b2 = b.reshape(1, Cout).astype(jnp.float32)

    if grouped:
        x_map = lambda cb, nt: (cb, nt, 0)
    else:
        x_map = lambda cb, nt: (0, nt, 0)

    flops = int(2 * n_pad * contr * cout_b * nblk)
    bytes_accessed = int(xcol.size * 2 * (1 if grouped else nblk)
                         + wpack.size * 2 + n_pad * Cout * 4 + Cout * 4)

    out = pl.pallas_call(
        functools.partial(_conv_mm_kernel, apply_act=apply_act,
                          slope=LRELU_SLOPE),
        out_shape=jax.ShapeDtypeStruct((n_pad, Cout), jnp.float32),
        grid_spec=pltpu.PrefetchScalarGridSpec(
            num_scalar_prefetch=0,
            grid=(nblk, n_tiles),                 # column blocks outer, N inner
            in_specs=[
                pl.BlockSpec((None, n_tile, contr), x_map),
                pl.BlockSpec((None, contr, cout_b), lambda cb, nt: (cb, 0, 0)),
                pl.BlockSpec((1, cout_b), lambda cb, nt: (0, cb)),
            ],
            out_specs=pl.BlockSpec((n_tile, cout_b), lambda cb, nt: (nt, cb)),
        ),
        compiler_params=pltpu.CompilerParams(
            dimension_semantics=("parallel", "parallel"),
            vmem_limit_bytes=vmem_limit),
        cost_estimate=pl.CostEstimate(flops=flops, transcendentals=0,
                                      bytes_accessed=bytes_accessed),
    )(xcol, wpack, b2)

    return out[:N].reshape(Nb, T_out, Cout)


# --------------------------- reference (check) -----------------------------

def _conv1d_ref(x, w, b, *, stride, padding, groups):
    # Same bf16 input rounding as the kernel, f32 accumulation.
    out = lax.conv_general_dilated(
        x.astype(COMPUTE_DTYPE),
        jnp.transpose(w, (2, 1, 0)).astype(COMPUTE_DTYPE),
        window_strides=(stride,), padding=[(padding, padding)],
        dimension_numbers=("NWC", "WIO", "NWC"),
        feature_group_count=groups,
        preferred_element_type=jnp.float32)
    return out + b[None, None, :]


def _check(name, got, ref, tol=2e-2):
    err = float(jnp.max(jnp.abs(got - ref)))
    scale = float(jnp.max(jnp.abs(ref))) + 1e-6
    assert err / scale < tol, f"{name}: relative error {err / scale:.3e}"


# ----------------------------- parameters ----------------------------------
# weight_norm / spectral_norm are parameterizations only; we initialize the
# effective conv weights directly (deterministic, PyTorch-default-like init).

def _conv_params(key, cout, cig, k):
    kw, kb = jax.random.split(key)
    fan_in = cig * k
    bound = 1.0 / (fan_in ** 0.5)
    w = jax.random.uniform(kw, (cout, cig, k), jnp.float32, -bound, bound)
    b = jax.random.uniform(kb, (cout,), jnp.float32, -bound, bound)
    return w, b


def _make_disc(key, specs, post):
    ks = jax.random.split(key, len(specs) + 1)
    convs = []
    for kk, (cin, cout, kern, s, g, p) in zip(ks[:-1], specs):
        convs.append(_conv_params(kk, cout, cin // g, kern))
    cin, cout, kern, s, g, p = post
    post_p = _conv_params(ks[-1], cout, cin // g, kern)
    return {"convs": convs, "post": post_p}


def init_params(key):
    keys = jax.random.split(key, 1 + len(PERIODS))
    return {
        "s": _make_disc(keys[0], DISC_S_SPECS, DISC_S_POST),
        "p": [_make_disc(k, DISC_P_SPECS, DISC_P_POST) for k in keys[1:]],
    }


# ----------------------------- discriminators ------------------------------

def discriminator_s(params, x):
    # x: (B, 1, T)  (PyTorch NCW at the interface)
    B = x.shape[0]
    h = jnp.transpose(x, (0, 2, 1))          # (B, T, C)  channels-last
    fmap = []
    for (w, b), (cin, cout, k, s, g, p) in zip(params["convs"], DISC_S_SPECS):
        h = conv1d_pallas(h, w, b, stride=s, padding=p, groups=g,
                          apply_act=True)
        fmap.append(jnp.transpose(h, (0, 2, 1)))       # back to (B, C, T)
    w, b = params["post"]
    _, _, k, s, g, p = DISC_S_POST
    h = conv1d_pallas(h, w, b, stride=s, padding=p, groups=g, apply_act=False)
    fmap.append(jnp.transpose(h, (0, 2, 1)))
    out = jnp.transpose(h, (0, 2, 1)).reshape(B, -1)   # torch.flatten(x,1,-1)
    return out, fmap


def discriminator_p(params, x, period):
    # x: (B, 1, T)
    B, C, T = x.shape
    if T % period != 0:
        n_pad = period - (T % period)
        x = jnp.pad(x, ((0, 0), (0, 0), (0, n_pad)), mode="reflect")
        T = T + n_pad
    x4 = x.reshape(B, C, T // period, period)                    # (B,C,T',P)
    h = jnp.transpose(x4, (0, 3, 2, 1)).reshape(B * period, T // period, C)

    def to_nchw(hh):   # (B*P, T', C) -> (B, C, T', P)  (PyTorch NCHW)
        _, Tp, Cc = hh.shape
        return jnp.transpose(hh.reshape(B, period, Tp, Cc), (0, 3, 2, 1))

    fmap = []
    for (w, b), (cin, cout, k, s, g, p) in zip(params["convs"], DISC_P_SPECS):
        h = conv1d_pallas(h, w, b, stride=s, padding=p, groups=g,
                          apply_act=True)
        fmap.append(to_nchw(h))
    w, b = params["post"]
    _, _, k, s, g, p = DISC_P_POST
    h = conv1d_pallas(h, w, b, stride=s, padding=p, groups=g, apply_act=False)
    fmap.append(to_nchw(h))
    out = to_nchw(h).reshape(B, -1)   # (B,1,T',P) flattened
    return out, fmap


def multi_period_discriminator(params, y, y_hat):
    y_d_rs, y_d_gs, fmap_rs, fmap_gs = [], [], [], []
    discs = [("s", params["s"], None)] + [
        ("p", pp, per) for pp, per in zip(params["p"], PERIODS)
    ]
    for kind, dparams, period in discs:
        if kind == "s":
            y_d_r, fmap_r = discriminator_s(dparams, y)
            y_d_g, fmap_g = discriminator_s(dparams, y_hat)
        else:
            y_d_r, fmap_r = discriminator_p(dparams, y, period)
            y_d_g, fmap_g = discriminator_p(dparams, y_hat, period)
        y_d_rs.append(y_d_r)
        y_d_gs.append(y_d_g)
        fmap_rs.append(fmap_r)
        fmap_gs.append(fmap_g)
    return y_d_rs, y_d_gs, fmap_rs, fmap_gs


# --------------------------------- main -------------------------------------

if __name__ == "__main__":
    key = jax.random.PRNGKey(0)
    k_y, k_yh, k_p, k1, k2, k3, k4 = jax.random.split(key, 7)

    # grouped conv (64->256, G=16, K=41, stride 4): block-diagonal packing path
    xg = jax.random.normal(k1, (2, 64, 64), jnp.float32)
    wgp, bgp = _conv_params(k2, 256, 4, 41)
    _check("grouped",
           conv1d_pallas(xg, wgp, bgp, stride=4, padding=20, groups=16,
                         apply_act=False),
           _conv1d_ref(xg, wgp, bgp, stride=4, padding=20, groups=16))

    # dense conv (16->32, K=5, stride 3); N not a multiple of 8 -> row padding
    xd = jax.random.normal(k3, (2, 37, 16), jnp.float32)
    wd, bd = _conv_params(k4, 32, 16, 5)
    _check("dense",
           conv1d_pallas(xd, wd, bd, stride=3, padding=2, groups=1,
                         apply_act=False),
           _conv1d_ref(xd, wd, bd, stride=3, padding=2, groups=1))

    # Cin == 1 first-layer case (1->16, K=15): small-contraction matmul path
    x1 = jax.random.normal(k1, (2, 64, 1), jnp.float32)
    w1, b1 = _conv_params(k2, 16, 1, 15)
    _check("cin1",
           conv1d_pallas(x1, w1, b1, stride=1, padding=7, groups=1,
                         apply_act=False),
           _conv1d_ref(x1, w1, b1, stride=1, padding=7, groups=1))

    params = init_params(k_p)
    y = jax.random.normal(k_y, (2, 1, 64), jnp.float32)
    y_hat = jax.random.normal(k_yh, (2, 1, 64), jnp.float32)

    outputs = jax.jit(multi_period_discriminator)(params, y, y_hat)
    jax.block_until_ready(outputs)
    print("KERNEL_OK")
</pallas_src>

<mosaic_0001>
module attributes {stable_mosaic.version = 11 : i64} {
  func.func @_conv_mm_kernel(%arg0: i32, %arg1: i32, %arg2: memref<1x32x1312xbf16, #tpu.memory_space<vmem>>, %arg3: memref<1x1312x128xbf16, #tpu.memory_space<vmem>>, %arg4: memref<1x128xf32, #tpu.memory_space<vmem>>, %arg5: memref<32x128xf32, #tpu.memory_space<vmem>>) attributes {dimension_semantics = [#tpu.dimension_semantics<parallel>, #tpu.dimension_semantics<parallel>], iteration_bounds = array<i64: 2, 1>, scalar_prefetch = 0 : i64, scratch_operands = 0 : i64, tpu.core_type = #tpu.core_type<tc>, window_params = [{transform_indices = @transform_0, window_bounds = array<i64: 1, 32, 1312>}, {transform_indices = @transform_1, window_bounds = array<i64: 1, 1312, 128>}, {transform_indices = @transform_2, window_bounds = array<i64: 1, 128>}, {transform_indices = @transform_3, window_bounds = array<i64: 32, 128>}]} {
    %c0 = arith.constant 0 : index
    %c0_0 = arith.constant 0 : index
    %c0_1 = arith.constant 0 : index
    %0 = vector.load %arg2[%c0, %c0_0, %c0_1] : memref<1x32x1312xbf16, #tpu.memory_space<vmem>>, vector<1x32x1312xbf16>
    %1 = vector.shape_cast %0 : vector<1x32x1312xbf16> to vector<32x1312xbf16>
    %c0_2 = arith.constant 0 : index
    %c0_3 = arith.constant 0 : index
    %c0_4 = arith.constant 0 : index
    %2 = vector.load %arg3[%c0_2, %c0_3, %c0_4] : memref<1x1312x128xbf16, #tpu.memory_space<vmem>>, vector<1x1312x128xbf16>
    %3 = vector.shape_cast %2 : vector<1x1312x128xbf16> to vector<1312x128xbf16>
    %cst = arith.constant dense<0.000000e+00> : vector<32x128xf32>
    %4 = tpu.matmul %1, %3, %cst {dimension_numbers = #tpu.dot_dimension_numbers<[1], [0], [0], [1], [0, 0, 1, 1], [], []>} : vector<32x1312xbf16>, vector<1312x128xbf16>, vector<32x128xf32> -> vector<32x128xf32>
    %c0_5 = arith.constant 0 : index
    %c0_6 = arith.constant 0 : index
    %5 = vector.load %arg4[%c0_5, %c0_6] : memref<1x128xf32, #tpu.memory_space<vmem>>, vector<1x128xf32>
    %6 = vector.broadcast %5 : vector<1x128xf32> to vector<32x128xf32>
    %7 = arith.addf %4, %6 : vector<32x128xf32>
    %c0_7 = arith.constant 0 : index
    %c0_8 = arith.constant 0 : index
    %8 = vector.load %arg5[%c0_7, %c0_8] : memref<32x128xf32, #tpu.memory_space<vmem>>, vector<32x128xf32>
    tpu.vector_store %arg5[%c0_7, %c0_8], %7 {strides = array<i32>} : memref<32x128xf32, #tpu.memory_space<vmem>>, vector<32x128xf32>,
    return
  }
  func.func @transform_0(%arg0: i32, %arg1: i32) -> (i32, i32, i32) {
    %c0_i32 = arith.constant 0 : i32
    %c0_i32_0 = arith.constant 0 : i32
    return %arg0, %arg1, %c0_i32 : i32, i32, i32
  }
  func.func @transform_1(%arg0: i32, %arg1: i32) -> (i32, i32, i32) {
    %c0_i32 = arith.constant 0 : i32
    %c0_i32_0 = arith.constant 0 : i32
    %c0_i32_1 = arith.constant 0 : i32
    return %arg0, %c0_i32, %c0_i32_0 : i32, i32, i32
  }
  func.func @transform_2(%arg0: i32, %arg1: i32) -> (i32, i32) {
    %c0_i32 = arith.constant 0 : i32
    %c0_i32_0 = arith.constant 0 : i32
    return %c0_i32, %arg0 : i32, i32
  }
  func.func @transform_3(%arg0: i32, %arg1: i32) -> (i32, i32) {
    %c0_i32 = arith.constant 0 : i32
    return %arg1, %arg0 : i32, i32
  }
}

</mosaic_0001>

<llo_original>
// kernel: tpu_custom_call.1
$region0: #{tpu_custom_call.1}
  #allocation0 [shape = 'u32[]', space=smem, size = 0x4, offset = 0x4, fixed_abs, tag = 'smem constant byte address 0x4 - core index']
  #allocation1 [shape = 'u32[144,128]{1,0:T(1,128)}', space=vmem, size = 0x12000, scoped, tag = 'internal scratch']
  %s0 = inlined_call_operand.hbm [shape: bf16[2,32,1312], index: 0, kind: input, shape index: {}]
  %s1 = inlined_call_operand.hbm [shape: bf16[2,1312,128], index: 1, kind: input, shape index: {}]
  %s2 = inlined_call_operand.vmem [shape: f32[1,256], index: 2, kind: input, shape index: {}]
  %s3 = inlined_call_operand.hbm [shape: f32[32,256], index: 3, kind: output, shape index: {}]
  %s4 = sld [smem:[#allocation0]]
  $region53: #{tpu_custom_call.1} parent=0
    _
  %s6 = ssub.s32 1, %s4
  %s7 = scalar_select 0, %s6, %s4
  $region1: #{tpu_custom_call.1} parent=0
    #allocation2 [shape = 'u8[180224]{0}', space=vmem, size = 0x2c000, scoped, tag = 'input window, operand 0']
    #allocation3 [shape = 's32[2]{0}', space=sflag, size = 0x8, scoped, tag = 'scoped memory for tpu_custom_call.1']
    #allocation4 [shape = 's32[2]{0}', space=sflag, size = 0x8, scoped, tag = 'scoped memory for tpu_custom_call.1']
    #allocation5 [shape = 'u8[671744]{0}', space=vmem, size = 0xa4000, scoped, tag = 'input window, operand 1']
    #allocation6 [shape = 's32[2]{0}', space=sflag, size = 0x8, scoped, tag = 'scoped memory for tpu_custom_call.1']
    #allocation7 [shape = 'u8[32768]{0}', space=vmem, size = 0x8000, scoped, tag = 'output window, operand 0']
    %8 = vsyncpa [#allocation3], 0
    %s9 = scalar_lea.sflag [#allocation3], 1
    %10 = vsyncpa %s9, 0
    %11 = vsyncpa [#allocation6], 0
    %s12 = scalar_lea.sflag [#allocation6], 1
    %13 = vsyncpa %s12, 0
    %14 = vsyncpa [#allocation4], 0
    %s15 = scalar_lea.sflag [#allocation4], 1
    %16 = vsyncpa %s15, 0
    loop: start=0, step=1, limit=4
    $region2: #{tpu_custom_call.1} parent=1 // loop_pre_header
      _
    $region3: #{tpu_custom_call.1} parent=1 // loop_header
      %s18 = sphi 0, %s22
      %p19 = scmp.ge.s32.totalorder %s18, 4
      %s25 = sphi 0, %s37
      %s26 = sphi 0, %s33
      %s27 = sphi 0, %s25
      %s28 = sphi 0, %s26
      %s29 = sphi 0, %s27
      %s30 = sphi 0, %s28
      %s42 = sphi 0, %s44
      %s45 = sphi 0, %s42
      %s46 = sphi 0, %s45
      %s62 = sphi 0, %s46
      %s68 = sphi 0, %s70
      %s71 = sphi 0, %s68
      %s72 = sphi 0, %s71
      %s88 = sphi 0, %s72
      %s94 = sphi 0, %s96
      %s97 = sphi 0, %s94
      %s98 = sphi 0, %s97
      %s114 = sphi 0, %s98
      %s122 = sphi 0, %s124
      %s125 = sphi 0, %s122
      %s126 = sphi 0, %s125
      %s142 = sphi 0, %s126
    $region4: #{tpu_custom_call.1} parent=1 // loop_header_branch
      %21 = sbr.rel (%p19) target = $region8
    $region5: #{tpu_custom_call.1} parent=1 // loop_body
      %s23 = ssub.s32 %s18, 1
      %s24 = ssub.s32 %s18, 2
      %s31 = sadd.s32 1, %s26
      %p32 = scmp.ge.s32.totalorder %s31, 1
      %s33 = scalar_select %p32, 0, %s31
      %s34 = sadd.s32 1, %s25
      %s35 = scalar_select %p32, %s34, %s25
      %p36 = scmp.ge.s32.totalorder %s35, 2
      %s37 = scalar_select %p36, 0, %s35
      %s38 = ssub.s32 %s25, %s37
      %s39 = ssub.s32 %s26, %s33
      %s40 = sor.u32 %s38, %s39
      %p41 = scmp.eq.s32.totalorder %s40, 0
      %s43 = sadd.s32 %s42, 1
      %s44 = scalar_select %p41, %s42, %s43
      %p47 = pneg %p41
      %p48 = scmp.eq.s32.totalorder %s18, 1
      %p49 = por %p47, %p48
      %p50 = scmp.ne.s32.totalorder %s42, %s45
      %p51 = scmp.eq.s32.totalorder %s18, 0
      %p52 = por %p50, %p51
      %p53 = scmp.ne.s32.totalorder %s42, %s45
      %p54 = scmp.eq.s32.totalorder %s23, 1
      %p55 = por %p53, %p54
      %p56 = scmp.ne.s32.totalorder %s45, %s46
      %p57 = scmp.eq.s32.totalorder %s23, 0
      %p58 = por %p56, %p57
      %p59 = scmp.ne.s32.totalorder %s45, %s46
      %p60 = scmp.eq.s32.totalorder %s24, 1
      %p61 = por %p59, %p60
      %p63 = scmp.ne.s32.totalorder %s46, %s62
      %p64 = scmp.eq.s32.totalorder %s24, 0
      %p65 = por %p63, %p64
      %s66 = ssub.s32 %s25, %s37
      %p67 = scmp.eq.s32.totalorder %s66, 0
      %s69 = sadd.s32 %s68, 1
      %s70 = scalar_select %p67, %s68, %s69
      %p73 = pneg %p67
      %p74 = scmp.eq.s32.totalorder %s18, 1
      %p75 = por %p73, %p74
      %p76 = scmp.ne.s32.totalorder %s68, %s71
      %p77 = scmp.eq.s32.totalorder %s18, 0
      %p78 = por %p76, %p77
      %p79 = scmp.ne.s32.totalorder %s68, %s71
      %p80 = scmp.eq.s32.totalorder %s23, 1
      %p81 = por %p79, %p80
      %p82 = scmp.ne.s32.totalorder %s71, %s72
      %p83 = scmp.eq.s32.totalorder %s23, 0
      %p84 = por %p82, %p83
      %p85 = scmp.ne.s32.totalorder %s71, %s72
      %p86 = scmp.eq.s32.totalorder %s24, 1
      %p87 = por %p85, %p86
      %p89 = scmp.ne.s32.totalorder %s72, %s88
      %p90 = scmp.eq.s32.totalorder %s24, 0
      %p91 = por %p89, %p90
      %s92 = ssub.s32 %s25, %s37
      %p93 = scmp.eq.s32.totalorder %s92, 0
      %s95 = sadd.s32 %s94, 1
      %s96 = scalar_select %p93, %s94, %s95
      %p99 = pneg %p93
      %p100 = scmp.eq.s32.totalorder %s18, 1
      %p101 = por %p99, %p100
      %p102 = scmp.ne.s32.totalorder %s94, %s97
      %p103 = scmp.eq.s32.totalorder %s18, 0
      %p104 = por %p102, %p103
      %p105 = scmp.ne.s32.totalorder %s94, %s97
      %p106 = scmp.eq.s32.totalorder %s23, 1
      %p107 = por %p105, %p106
      %p108 = scmp.ne.s32.totalorder %s97, %s98
      %p109 = scmp.eq.s32.totalorder %s23, 0
      %p110 = por %p108, %p109
      %p111 = scmp.ne.s32.totalorder %s97, %s98
      %p112 = scmp.eq.s32.totalorder %s24, 1
      %p113 = por %p111, %p112
      %p115 = scmp.ne.s32.totalorder %s98, %s114
      %p116 = scmp.eq.s32.totalorder %s24, 0
      %p117 = por %p115, %p116
      %s118 = ssub.s32 %s26, %s33
      %s119 = ssub.s32 %s25, %s37
      %s120 = sor.u32 %s118, %s119
      %p121 = scmp.eq.s32.totalorder %s120, 0
      %s123 = sadd.s32 %s122, 1
      %s124 = scalar_select %p121, %s122, %s123
      %p127 = pneg %p121
      %p128 = scmp.eq.s32.totalorder %s18, 1
      %p129 = por %p127, %p128
      %p130 = scmp.ne.s32.totalorder %s122, %s125
      %p131 = scmp.eq.s32.totalorder %s18, 0
      %p132 = por %p130, %p131
      %p133 = scmp.ne.s32.totalorder %s122, %s125
      %p134 = scmp.eq.s32.totalorder %s23, 1
      %p135 = por %p133, %p134
      %p136 = scmp.ne.s32.totalorder %s125, %s126
      %p137 = scmp.eq.s32.totalorder %s23, 0
      %p138 = por %p136, %p137
      %p139 = scmp.ne.s32.totalorder %s125, %s126
      %p140 = scmp.eq.s32.totalorder %s24, 1
      %p141 = por %p139, %p140
      %p143 = scmp.ne.s32.totalorder %s126, %s142
      %p144 = scmp.eq.s32.totalorder %s24, 0
      %p145 = por %p143, %p144
      %p146 = scmp.le.s32.totalorder 1, %s18
      %p147 = scmp.lt.s32.totalorder %s18, 3
      %p148 = pnand %p146, %p147
      %p149 = pneg %p148
      // Predicated region
      $region9: #{tpu_custom_call.1} parent=5 // pred_check
        _
      $region10: #{tpu_custom_call.1} parent=5 // pred_check_branch
        %151 = sbr.rel (%p148) target = $region12
      $region11: #{tpu_custom_call.1} parent=5 // pred_region
        %s152 = ssub.s32 %s18, 1
      $region12: #{tpu_custom_call.1} parent=5 // pred_fallthru
        _
      %p153 = scmp.lt.s32.totalorder %s18, 2
      // Predicated region
      $region13: #{tpu_custom_call.1} parent=5 // pred_check
        %p154 = pneg %p153
      $region14: #{tpu_custom_call.1} parent=5 // pred_check_branch
        %156 = sbr.rel (%p154) target = $region16
      $region15: #{tpu_custom_call.1} parent=5 // pred_region
        // Predicated region
        $region17: #{tpu_custom_call.1} parent=15 // pred_check
          %p157 = pneg %p52
        $region18: #{tpu_custom_call.1} parent=15 // pred_check_branch
          %159 = sbr.rel (%p157) target = $region20
        $region19: #{tpu_custom_call.1} parent=15 // pred_region
          %s160 = sand.u32 %s42, 1
          %s161 = scalar_lea.sflag [#allocation3], %s160
          %s162 = sand.u32 %s42, 1
          %s163 = smul.addr %s162, 176
          %s164 = scalar_lea.vmem [#allocation2], %s163
          %s165 = smul.u32 4, %s26
          %s167 = ssub.s32 2816, 2816
          %168 = vsyncadd %s161, %s167
          %s169 = smul.addr %s165, 11
          %s170 = smul.addr %s25, 44
          %s171 = sadd.s32 %s169, %s170
          %s172 = smul.addr %s171, 64
          %s173 = scalar_lea.hbm %s0, %s172
          %s174 = sshll.u32 %s164, 4
          %s175 = int_to_ptr.vmem [resolvable:$true] %s174
          %180 = dma.hbm_to_vmem [thread:$0]  %s173, 2816, %s175, %s161, 704, 704, 44
        $region20: #{tpu_custom_call.1} parent=15 // pred_fallthru
          _
        // Predicated region
        $region21: #{tpu_custom_call.1} parent=15 // pred_check
          %p181 = pneg %p78
        $region22: #{tpu_custom_call.1} parent=15 // pred_check_branch
          %183 = sbr.rel (%p181) target = $region24
        $region23: #{tpu_custom_call.1} parent=15 // pred_region
          %s184 = sand.u32 %s68, 1
          %s185 = scalar_lea.sflag [#allocation6], %s184
          %s186 = sand.u32 %s68, 1
          %s187 = smul.addr %s186, 656
          %s188 = scalar_lea.vmem [#allocation5], %s187
          %s190 = ssub.s32 10496, 10496
          %191 = vsyncadd %s185, %s190
          %s192 = smul.addr %s25, 164
          %s193 = smul.addr %s192, 64
          %s194 = scalar_lea.hbm %s1, %s193
          %s195 = sshll.u32 %s188, 4
          %s196 = int_to_ptr.vmem [resolvable:$true] %s195
          %201 = dma.hbm_to_vmem [thread:$0]  %s194, 10496, %s196, %s185, 64, 64, 4
        $region24: #{tpu_custom_call.1} parent=15 // pred_fallthru
          _
        // Predicated region
        $region25: #{tpu_custom_call.1} parent=15 // pred_check
          %p202 = pneg %p104
        $region26: #{tpu_custom_call.1} parent=15 // pred_check_branch
          %204 = sbr.rel (%p202) target = $region28
        $region27: #{tpu_custom_call.1} parent=15 // pred_region
          %p205 = scmp.lt.s32.totalorder %s25, 1
          %s206 = scalar_select %p205, %s25, 1
          %s207 = scalar_lea.vmem %s2, %s206
        $region28: #{tpu_custom_call.1} parent=15 // pred_fallthru
          _
      $region16: #{tpu_custom_call.1} parent=5 // pred_fallthru
        _
      %p208 = scmp.le.s32.totalorder 1, %s18
      %p209 = scmp.lt.s32.totalorder %s18, 3
      %p210 = pnand %p208, %p209
      %p211 = pneg %p210
      // Predicated region
      $region29: #{tpu_custom_call.1} parent=5 // pred_check
        _
      $region30: #{tpu_custom_call.1} parent=5 // pred_check_branch
        %213 = sbr.rel (%p210) target = $region32
      $region31: #{tpu_custom_call.1} parent=5 // pred_region
        %s214 = ssub.s32 %s18, 1
        %s215 = sand.u32 %s45, 1
        %s216 = scalar_lea.sflag [#allocation3], %s215
        %s217 = sand.u32 %s45, 1
        %s218 = smul.addr %s217, 176
        %s219 = scalar_lea.vmem [#allocation2], %s218
        // Predicated region
        $region33: #{tpu_custom_call.1} parent=31 // pred_check
          %p220 = pneg %p58
        $region34: #{tpu_custom_call.1} parent=31 // pred_check_branch
          %222 = sbr.rel (%p220) target = $region36
        $region35: #{tpu_custom_call.1} parent=31 // pred_region
          %223 = dma.done %s216, 2816
        $region36: #{tpu_custom_call.1} parent=31 // pred_fallthru
          _
        %s224 = sand.u32 %s71, 1
        %s225 = scalar_lea.sflag [#allocation6], %s224
        %s226 = sand.u32 %s71, 1
        %s227 = smul.addr %s226, 656
        %s228 = scalar_lea.vmem [#allocation5], %s227
        // Predicated region
        $region37: #{tpu_custom_call.1} parent=31 // pred_check
          %p229 = pneg %p84
        $region38: #{tpu_custom_call.1} parent=31 // pred_check_branch
          %231 = sbr.rel (%p229) target = $region40
        $region39: #{tpu_custom_call.1} parent=31 // pred_region
          %232 = dma.done %s225, 10496
        $region40: #{tpu_custom_call.1} parent=31 // pred_fallthru
          _
        %s233 = sand.u32 %s45, 1
        %s234 = scalar_lea.sflag [#allocation3], %s233
        %s235 = sand.u32 %s45, 1
        %s236 = smul.addr %s235, 176
        %s237 = scalar_lea.vmem [#allocation2], %s236
        %p238 = pneg %p58
        %p239 = pneg %p55
        %s240 = sand.u32 %s71, 1
        %s241 = scalar_lea.sflag [#allocation6], %s240
        %s242 = sand.u32 %s71, 1
        %s243 = smul.addr %s242, 656
        %s244 = scalar_lea.vmem [#allocation5], %s243
        %p245 = pneg %p84
        %p246 = pneg %p81
        %p247 = scmp.lt.s32.totalorder %s27, 1
        %s248 = scalar_select %p247, %s27, 1
        %s249 = scalar_lea.vmem %s2, %s248
        %p250 = pneg %p110
        %p251 = pneg %p107
        %p252 = pneg %p138
        %p253 = pneg %p135
        %s254 = sand.u32 %s125, 1
        %s255 = scalar_lea.sflag [#allocation4], %s254
        %s256 = sand.u32 %s125, 1
        %s257 = smul.addr %s256, 32
        %s258 = scalar_lea.vmem [#allocation7], %s257
        %s259 = smul.u32 4, %s28
        %p260 = scmp.lt.s32.totalorder %s27, 1
        %s261 = scalar_select %p260, %s27, 1
        %s262 = scalar_lea.vmem %s2, %s261
        %s263 = smul.u32 4, %s28
        %v265 = vld [vmem:[%s219] sm:$0xff]
        %v266 = vld [vmem:[%s219 + $0x8] sm:$0xff]
        %v267 = vld [vmem:[%s219 + $0x10] sm:$0xff]
        %v268 = vld [vmem:[%s219 + $0x18] sm:$0xff]
        %v269 = vld [vmem:[%s219 + $0x20] sm:$0xff]
        %v270 = vld [vmem:[%s219 + $0x28] sm:$0xf]
        %v271 = vld [vmem:[%s219 + $0x2c] sm:$0xff]
        %v272 = vld [vmem:[%s219 + $0x34] sm:$0xff]
        %v273 = vld [vmem:[%s219 + $0x3c] sm:$0xff]
        %v274 = vld [vmem:[%s219 + $0x44] sm:$0xff]
        %v275 = vld [vmem:[%s219 + $0x4c] sm:$0xff]
        %v276 = vld [vmem:[%s219 + $0x54] sm:$0xf]
        %v277 = vld [vmem:[%s219 + $0x58] sm:$0xff]
        %v278 = vld [vmem:[%s219 + $0x60] sm:$0xff]
        %v279 = vld [vmem:[%s219 + $0x68] sm:$0xff]
        %v280 = vld [vmem:[%s219 + $0x70] sm:$0xff]
        %v281 = vld [vmem:[%s219 + $0x78] sm:$0xff]
        %v282 = vld [vmem:[%s219 + $0x80] sm:$0xf]
        %v283 = vld [vmem:[%s219 + $0x84] sm:$0xff]
        %v284 = vld [vmem:[%s219 + $0x8c] sm:$0xff]
        %v285 = vld [vmem:[%s219 + $0x94] sm:$0xff]
        %v286 = vld [vmem:[%s219 + $0x9c] sm:$0xff]
        %v287 = vld [vmem:[%s219 + $0xa4] sm:$0xff]
        %v288 = vld [vmem:[%s219 + $0xac] sm:$0xf]
        %v289 = vld [vmem:[%s228] sm:$0xf]
        %v290 = vld [vmem:[%s228 + $0x4] sm:$0xf]
        %v291 = vld [vmem:[%s228 + $0x8] sm:$0xf]
        %v292 = vld [vmem:[%s228 + $0xc] sm:$0xf]
        %v293 = vld [vmem:[%s228 + $0x10] sm:$0xf]
        %v294 = vld [vmem:[%s228 + $0x14] sm:$0xf]
        %v295 = vld [vmem:[%s228 + $0x18] sm:$0xf]
        %v296 = vld [vmem:[%s228 + $0x1c] sm:$0xf]
        %v297 = vld [vmem:[%s228 + $0x20] sm:$0xf]
        %v298 = vld [vmem:[%s228 + $0x24] sm:$0xf]
        %v299 = vld [vmem:[%s228 + $0x28] sm:$0xf]
        %v300 = vld [vmem:[%s228 + $0x2c] sm:$0xf]
        %v301 = vld [vmem:[%s228 + $0x30] sm:$0xf]
        %v302 = vld [vmem:[%s228 + $0x34] sm:$0xf]
        %v303 = vld [vmem:[%s228 + $0x38] sm:$0xf]
        %v304 = vld [vmem:[%s228 + $0x3c] sm:$0xf]
        %v305 = vld [vmem:[%s228 + $0x40] sm:$0xf]
        %v306 = vld [vmem:[%s228 + $0x44] sm:$0xf]
        %v307 = vld [vmem:[%s228 + $0x48] sm:$0xf]
        %v308 = vld [vmem:[%s228 + $0x4c] sm:$0xf]
        %v309 = vld [vmem:[%s228 + $0x50] sm:$0xf]
        %v310 = vld [vmem:[%s228 + $0x54] sm:$0xf]
        %v311 = vld [vmem:[%s228 + $0x58] sm:$0xf]
        %v312 = vld [vmem:[%s228 + $0x5c] sm:$0xf]
        %v313 = vld [vmem:[%s228 + $0x60] sm:$0xf]
        %v314 = vld [vmem:[%s228 + $0x64] sm:$0xf]
        %v315 = vld [vmem:[%s228 + $0x68] sm:$0xf]
        %v316 = vld [vmem:[%s228 + $0x6c] sm:$0xf]
        %v317 = vld [vmem:[%s228 + $0x70] sm:$0xf]
        %v318 = vld [vmem:[%s228 + $0x74] sm:$0xf]
        %v319 = vld [vmem:[%s228 + $0x78] sm:$0xf]
        %v320 = vld [vmem:[%s228 + $0x7c] sm:$0xf]
        %v321 = vld [vmem:[%s228 + $0x80] sm:$0xf]
        %v322 = vld [vmem:[%s228 + $0x84] sm:$0xf]
        %v323 = vld [vmem:[%s228 + $0x88] sm:$0xf]
        %v324 = vld [vmem:[%s228 + $0x8c] sm:$0xf]
        %v325 = vld [vmem:[%s228 + $0x90] sm:$0xf]
        %v326 = vld [vmem:[%s228 + $0x94] sm:$0xf]
        %v327 = vld [vmem:[%s228 + $0x98] sm:$0xf]
        %v328 = vld [vmem:[%s228 + $0x9c] sm:$0xf]
        %v329 = vld [vmem:[%s228 + $0xa0] sm:$0xf]
        %v330 = vld [vmem:[%s228 + $0xa4] sm:$0xf]
        %v331 = vld [vmem:[%s228 + $0xa8] sm:$0xf]
        %v332 = vld [vmem:[%s228 + $0xac] sm:$0xf]
        %v333 = vld [vmem:[%s228 + $0xb0] sm:$0xf]
        %v334 = vld [vmem:[%s228 + $0xb4] sm:$0xf]
        %v335 = vld [vmem:[%s228 + $0xb8] sm:$0xf]
        %v336 = vld [vmem:[%s228 + $0xbc] sm:$0xf]
        %v337 = vld [vmem:[%s228 + $0xc0] sm:$0xf]
        %v338 = vld [vmem:[%s228 + $0xc4] sm:$0xf]
        %v339 = vld [vmem:[%s228 + $0xc8] sm:$0xf]
        %v340 = vld [vmem:[%s228 + $0xcc] sm:$0xf]
        %v341 = vld [vmem:[%s228 + $0xd0] sm:$0xf]
        %v342 = vld [vmem:[%s228 + $0xd4] sm:$0xf]
        %v343 = vld [vmem:[%s228 + $0xd8] sm:$0xf]
        %v344 = vld [vmem:[%s228 + $0xdc] sm:$0xf]
        %v345 = vld [vmem:[%s228 + $0xe0] sm:$0xf]
        %v346 = vld [vmem:[%s228 + $0xe4] sm:$0xf]
        %v347 = vld [vmem:[%s228 + $0xe8] sm:$0xf]
        %v348 = vld [vmem:[%s228 + $0xec] sm:$0xf]
        %v349 = vld [vmem:[%s228 + $0xf0] sm:$0xf]
        %v350 = vld [vmem:[%s228 + $0xf4] sm:$0xf]
        %v351 = vld [vmem:[%s228 + $0xf8] sm:$0xf]
        %v352 = vld [vmem:[%s228 + $0xfc] sm:$0xf]
        %v353 = vld [vmem:[%s228 + $0x100] sm:$0xf]
        %v354 = vld [vmem:[%s228 + $0x104] sm:$0xf]
        %v355 = vld [vmem:[%s228 + $0x108] sm:$0xf]
        %v356 = vld [vmem:[%s228 + $0x10c] sm:$0xf]
        %v357 = vld [vmem:[%s228 + $0x110] sm:$0xf]
        %v358 = vld [vmem:[%s228 + $0x114] sm:$0xf]
        %v359 = vld [vmem:[%s228 + $0x118] sm:$0xf]
        %v360 = vld [vmem:[%s228 + $0x11c] sm:$0xf]
        %v361 = vld [vmem:[%s228 + $0x120] sm:$0xf]
        %v362 = vld [vmem:[%s228 + $0x124] sm:$0xf]
        %v363 = vld [vmem:[%s228 + $0x128] sm:$0xf]
        %v364 = vld [vmem:[%s228 + $0x12c] sm:$0xf]
        %v365 = vld [vmem:[%s228 + $0x130] sm:$0xf]
        %v366 = vld [vmem:[%s228 + $0x134] sm:$0xf]
        %v367 = vld [vmem:[%s228 + $0x138] sm:$0xf]
        %v368 = vld [vmem:[%s228 + $0x13c] sm:$0xf]
        %v369 = vld [vmem:[%s228 + $0x140] sm:$0xf]
        %v370 = vld [vmem:[%s228 + $0x144] sm:$0xf]
        %v371 = vld [vmem:[%s228 + $0x148] sm:$0xf]
        %v372 = vld [vmem:[%s228 + $0x14c] sm:$0xf]
        %v373 = vld [vmem:[%s228 + $0x150] sm:$0xf]
        %v374 = vld [vmem:[%s228 + $0x154] sm:$0xf]
        %v375 = vld [vmem:[%s228 + $0x158] sm:$0xf]
        %v376 = vld [vmem:[%s228 + $0x15c] sm:$0xf]
        %v377 = vld [vmem:[%s228 + $0x160] sm:$0xf]
        %v378 = vld [vmem:[%s228 + $0x164] sm:$0xf]
        %v379 = vld [vmem:[%s228 + $0x168] sm:$0xf]
        %v380 = vld [vmem:[%s228 + $0x16c] sm:$0xf]
        %v381 = vld [vmem:[%s228 + $0x170] sm:$0xf]
        %v382 = vld [vmem:[%s228 + $0x174] sm:$0xf]
        %v383 = vld [vmem:[%s228 + $0x178] sm:$0xf]
        %v384 = vld [vmem:[%s228 + $0x17c] sm:$0xf]
        %v385 = vld [vmem:[%s228 + $0x180] sm:$0xf]
        %v386 = vld [vmem:[%s228 + $0x184] sm:$0xf]
        %v387 = vld [vmem:[%s228 + $0x188] sm:$0xf]
        %v388 = vld [vmem:[%s228 + $0x18c] sm:$0xf]
        %v389 = vld [vmem:[%s228 + $0x190] sm:$0xf]
        %v390 = vld [vmem:[%s228 + $0x194] sm:$0xf]
        %v391 = vld [vmem:[%s228 + $0x198] sm:$0xf]
        %v392 = vld [vmem:[%s228 + $0x19c] sm:$0xf]
        %v393 = vld [vmem:[%s228 + $0x1a0] sm:$0xf]
        %v394 = vld [vmem:[%s228 + $0x1a4] sm:$0xf]
        %v395 = vld [vmem:[%s228 + $0x1a8] sm:$0xf]
        %v396 = vld [vmem:[%s228 + $0x1ac] sm:$0xf]
        %v397 = vld [vmem:[%s228 + $0x1b0] sm:$0xf]
        %v398 = vld [vmem:[%s228 + $0x1b4] sm:$0xf]
        %v399 = vld [vmem:[%s228 + $0x1b8] sm:$0xf]
        %v400 = vld [vmem:[%s228 + $0x1bc] sm:$0xf]
        %v401 = vld [vmem:[%s228 + $0x1c0] sm:$0xf]
        %v402 = vld [vmem:[%s228 + $0x1c4] sm:$0xf]
        %v403 = vld [vmem:[%s228 + $0x1c8] sm:$0xf]
        %v404 = vld [vmem:[%s228 + $0x1cc] sm:$0xf]
        %v405 = vld [vmem:[%s228 + $0x1d0] sm:$0xf]
        %v406 = vld [vmem:[%s228 + $0x1d4] sm:$0xf]
        %v407 = vld [vmem:[%s228 + $0x1d8] sm:$0xf]
        %v408 = vld [vmem:[%s228 + $0x1dc] sm:$0xf]
        %v409 = vld [vmem:[%s228 + $0x1e0] sm:$0xf]
        %v410 = vld [vmem:[%s228 + $0x1e4] sm:$0xf]
        %v411 = vld [vmem:[%s228 + $0x1e8] sm:$0xf]
        %v412 = vld [vmem:[%s228 + $0x1ec] sm:$0xf]
        %v413 = vld [vmem:[%s228 + $0x1f0] sm:$0xf]
        %v414 = vld [vmem:[%s228 + $0x1f4] sm:$0xf]
        %v415 = vld [vmem:[%s228 + $0x1f8] sm:$0xf]
        %v416 = vld [vmem:[%s228 + $0x1fc] sm:$0xf]
        %v417 = vld [vmem:[%s228 + $0x200] sm:$0xf]
        %v418 = vld [vmem:[%s228 + $0x204] sm:$0xf]
        %v419 = vld [vmem:[%s228 + $0x208] sm:$0xf]
        %v420 = vld [vmem:[%s228 + $0x20c] sm:$0xf]
        %v421 = vld [vmem:[%s228 + $0x210] sm:$0xf]
        %v422 = vld [vmem:[%s228 + $0x214] sm:$0xf]
        %v423 = vld [vmem:[%s228 + $0x218] sm:$0xf]
        %v424 = vld [vmem:[%s228 + $0x21c] sm:$0xf]
        %v425 = vld [vmem:[%s228 + $0x220] sm:$0xf]
        %v426 = vld [vmem:[%s228 + $0x224] sm:$0xf]
        %v427 = vld [vmem:[%s228 + $0x228] sm:$0xf]
        %v428 = vld [vmem:[%s228 + $0x22c] sm:$0xf]
        %v429 = vld [vmem:[%s228 + $0x230] sm:$0xf]
        %v430 = vld [vmem:[%s228 + $0x234] sm:$0xf]
        %v431 = vld [vmem:[%s228 + $0x238] sm:$0xf]
        %v432 = vld [vmem:[%s228 + $0x23c] sm:$0xf]
        %v433 = vld [vmem:[%s228 + $0x240] sm:$0xf]
        %v434 = vld [vmem:[%s228 + $0x244] sm:$0xf]
        %v435 = vld [vmem:[%s228 + $0x248] sm:$0xf]
        %v436 = vld [vmem:[%s228 + $0x24c] sm:$0xf]
        %v437 = vld [vmem:[%s228 + $0x250] sm:$0xf]
        %v438 = vld [vmem:[%s228 + $0x254] sm:$0xf]
        %v439 = vld [vmem:[%s228 + $0x258] sm:$0xf]
        %v440 = vld [vmem:[%s228 + $0x25c] sm:$0xf]
        %v441 = vld [vmem:[%s228 + $0x260] sm:$0xf]
        %v442 = vld [vmem:[%s228 + $0x264] sm:$0xf]
        %v443 = vld [vmem:[%s228 + $0x268] sm:$0xf]
        %v444 = vld [vmem:[%s228 + $0x26c] sm:$0xf]
        %v445 = vld [vmem:[%s228 + $0x270] sm:$0xf]
        %v446 = vld [vmem:[%s228 + $0x274] sm:$0xf]
        %v447 = vld [vmem:[%s228 + $0x278] sm:$0xf]
        %v448 = vld [vmem:[%s228 + $0x27c] sm:$0xf]
        %v449 = vld [vmem:[%s228 + $0x280] sm:$0xf]
        %v450 = vld [vmem:[%s228 + $0x284] sm:$0xf]
        %v451 = vld [vmem:[%s228 + $0x288] sm:$0xf]
        %v452 = vld [vmem:[%s228 + $0x28c] sm:$0xf]
        %v453 = vld [vmem:[%s262] sm:$0x1]
        %v455 = vlaneseq
        %v456 = vshrl.u32 %v455, 7
        %v457 = vsub.s32 0, %v456
        %v458 = vrot.slane %v453, %v457
        %v484 = vunpack.c.l.b16 %v265
        %v485 = vunpack.c.h.b16 %v265
        %v486 = vunpack.c.l.b16 %v266
        %v487 = vunpack.c.h.b16 %v266
        %v488 = vunpack.c.l.b16 %v267
        %v489 = vunpack.c.h.b16 %v267
        %v490 = vunpack.c.l.b16 %v268
        %v491 = vunpack.c.h.b16 %v268
        %v492 = vunpack.c.l.b16 %v269
        %v493 = vunpack.c.h.b16 %v269
        %v494 = vunpack.c.l.b16 %v270
        %v495 = vunpack.c.l.b16 %v271
        %v496 = vunpack.c.h.b16 %v271
        %v497 = vunpack.c.l.b16 %v272
        %v498 = vunpack.c.h.b16 %v272
        %v499 = vunpack.c.l.b16 %v273
        %v500 = vunpack.c.h.b16 %v273
        %v501 = vunpack.c.l.b16 %v274
        %v502 = vunpack.c.h.b16 %v274
        %v503 = vunpack.c.l.b16 %v275
        %v504 = vunpack.c.h.b16 %v275
        %v505 = vunpack.c.l.b16 %v276
        %v506 = vunpack.c.l.b16 %v277
        %v507 = vunpack.c.h.b16 %v277
        %v508 = vunpack.c.l.b16 %v278
        %v509 = vunpack.c.h.b16 %v278
        %v510 = vunpack.c.l.b16 %v279
        %v511 = vunpack.c.h.b16 %v279
        %v512 = vunpack.c.l.b16 %v280
        %v513 = vunpack.c.h.b16 %v280
        %v514 = vunpack.c.l.b16 %v281
        %v515 = vunpack.c.h.b16 %v281
        %v516 = vunpack.c.l.b16 %v282
        %v517 = vunpack.c.l.b16 %v283
        %v518 = vunpack.c.h.b16 %v283
        %v519 = vunpack.c.l.b16 %v284
        %v520 = vunpack.c.h.b16 %v284
        %v521 = vunpack.c.l.b16 %v285
        %v522 = vunpack.c.h.b16 %v285
        %v523 = vunpack.c.l.b16 %v286
        %v524 = vunpack.c.h.b16 %v286
        %v525 = vunpack.c.l.b16 %v287
        %v526 = vunpack.c.h.b16 %v287
        %v527 = vunpack.c.l.b16 %v288
        %v528 = vpack.c.b16 %v495, %v484
        %v529 = vpack.c.b16 %v496, %v485
        %v530 = vpack.c.b16 %v497, %v486
        %v531 = vpack.c.b16 %v498, %v487
        %v532 = vpack.c.b16 %v499, %v488
        %v533 = vpack.c.b16 %v500, %v489
        %v534 = vpack.c.b16 %v501, %v490
        %v535 = vpack.c.b16 %v502, %v491
        %v536 = vpack.c.b16 %v503, %v492
        %v537 = vpack.c.b16 %v504, %v493
        %v538 = vpack.c.b16 %v505, %v494
        %v539 = vpack.c.b16 %v517, %v506
        %v540 = vpack.c.b16 %v518, %v507
        %v541 = vpack.c.b16 %v519, %v508
        %v542 = vpack.c.b16 %v520, %v509
        %v543 = vpack.c.b16 %v521, %v510
        %v544 = vpack.c.b16 %v522, %v511
        %v545 = vpack.c.b16 %v523, %v512
        %v546 = vpack.c.b16 %v524, %v513
        %v547 = vpack.c.b16 %v525, %v514
        %v548 = vpack.c.b16 %v526, %v515
        %v549 = vpack.c.b16 %v527, %v516
        %v734 = vunpack.c.l.b16 %v289
        %v735 = vunpack.c.l.b16 %v290
        %v736 = vunpack.c.l.b16 %v291
        %v737 = vunpack.c.l.b16 %v292
        %v738 = vunpack.c.l.b16 %v293
        %v739 = vunpack.c.l.b16 %v294
        %v740 = vunpack.c.l.b16 %v295
        %v741 = vunpack.c.l.b16 %v296
        %v742 = vunpack.c.l.b16 %v297
        %v743 = vunpack.c.l.b16 %v298
        %v744 = vunpack.c.l.b16 %v299
        %v745 = vunpack.c.l.b16 %v300
        %v746 = vunpack.c.l.b16 %v301
        %v747 = vunpack.c.l.b16 %v302
        %v748 = vunpack.c.l.b16 %v303
        %v749 = vunpack.c.l.b16 %v304
        %v750 = vunpack.c.l.b16 %v305
        %v751 = vunpack.c.l.b16 %v306
        %v752 = vunpack.c.l.b16 %v307
        %v753 = vunpack.c.l.b16 %v308
        %v754 = vunpack.c.l.b16 %v309
        %v755 = vunpack.c.l.b16 %v310
        %v756 = vunpack.c.l.b16 %v311
        %v757 = vunpack.c.l.b16 %v312
        %v758 = vunpack.c.l.b16 %v313
        %v759 = vunpack.c.l.b16 %v314
        %v760 = vunpack.c.l.b16 %v315
        %v761 = vunpack.c.l.b16 %v316
        %v762 = vunpack.c.l.b16 %v317
        %v763 = vunpack.c.l.b16 %v318
        %v764 = vunpack.c.l.b16 %v319
        %v765 = vunpack.c.l.b16 %v320
        %v766 = vunpack.c.l.b16 %v321
        %v767 = vunpack.c.l.b16 %v322
        %v768 = vunpack.c.l.b16 %v323
        %v769 = vunpack.c.l.b16 %v324
        %v770 = vunpack.c.l.b16 %v325
        %v771 = vunpack.c.l.b16 %v326
        %v772 = vunpack.c.l.b16 %v327
        %v773 = vunpack.c.l.b16 %v328
        %v774 = vunpack.c.l.b16 %v329
        %v775 = vunpack.c.l.b16 %v330
        %v776 = vunpack.c.l.b16 %v331
        %v777 = vunpack.c.l.b16 %v332
        %v778 = vunpack.c.l.b16 %v333
        %v779 = vunpack.c.l.b16 %v334
        %v780 = vunpack.c.l.b16 %v335
        %v781 = vunpack.c.l.b16 %v336
        %v782 = vunpack.c.l.b16 %v337
        %v783 = vunpack.c.l.b16 %v338
        %v784 = vunpack.c.l.b16 %v339
        %v785 = vunpack.c.l.b16 %v340
        %v786 = vunpack.c.l.b16 %v341
        %v787 = vunpack.c.l.b16 %v342
        %v788 = vunpack.c.l.b16 %v343
        %v789 = vunpack.c.l.b16 %v344
        %v790 = vunpack.c.l.b16 %v345
        %v791 = vunpack.c.l.b16 %v346
        %v792 = vunpack.c.l.b16 %v347
        %v793 = vunpack.c.l.b16 %v348
        %v794 = vunpack.c.l.b16 %v349
        %v795 = vunpack.c.l.b16 %v350
        %v796 = vunpack.c.l.b16 %v351
        %v797 = vunpack.c.l.b16 %v352
        %v798 = vunpack.c.l.b16 %v353
        %v799 = vunpack.c.l.b16 %v354
        %v800 = vunpack.c.l.b16 %v355
        %v801 = vunpack.c.l.b16 %v356
        %v802 = vunpack.c.l.b16 %v357
        %v803 = vunpack.c.l.b16 %v358
        %v804 = vunpack.c.l.b16 %v359
        %v805 = vunpack.c.l.b16 %v360
        %v806 = vunpack.c.l.b16 %v361
        %v807 = vunpack.c.l.b16 %v362
        %v808 = vunpack.c.l.b16 %v363
        %v809 = vunpack.c.l.b16 %v364
        %v810 = vunpack.c.l.b16 %v365
        %v811 = vunpack.c.l.b16 %v366
        %v812 = vunpack.c.l.b16 %v367
        %v813 = vunpack.c.l.b16 %v368
        %v814 = vunpack.c.l.b16 %v369
        %v815 = vunpack.c.l.b16 %v370
        %v816 = vunpack.c.l.b16 %v371
        %v817 = vunpack.c.l.b16 %v372
        %v818 = vunpack.c.l.b16 %v373
        %v819 = vunpack.c.l.b16 %v374
        %v820 = vunpack.c.l.b16 %v375
        %v821 = vunpack.c.l.b16 %v376
        %v822 = vunpack.c.l.b16 %v377
        %v823 = vunpack.c.l.b16 %v378
        %v824 = vunpack.c.l.b16 %v379
        %v825 = vunpack.c.l.b16 %v380
        %v826 = vunpack.c.l.b16 %v381
        %v827 = vunpack.c.l.b16 %v382
        %v828 = vunpack.c.l.b16 %v383
        %v829 = vunpack.c.l.b16 %v384
        %v830 = vunpack.c.l.b16 %v385
        %v831 = vunpack.c.l.b16 %v386
        %v832 = vunpack.c.l.b16 %v387
        %v833 = vunpack.c.l.b16 %v388
        %v834 = vunpack.c.l.b16 %v389
        %v835 = vunpack.c.l.b16 %v390
        %v836 = vunpack.c.l.b16 %v391
        %v837 = vunpack.c.l.b16 %v392
        %v838 = vunpack.c.l.b16 %v393
        %v839 = vunpack.c.l.b16 %v394
        %v840 = vunpack.c.l.b16 %v395
        %v841 = vunpack.c.l.b16 %v396
        %v842 = vunpack.c.l.b16 %v397
        %v843 = vunpack.c.l.b16 %v398
        %v844 = vunpack.c.l.b16 %v399
        %v845 = vunpack.c.l.b16 %v400
        %v846 = vunpack.c.l.b16 %v401
        %v847 = vunpack.c.l.b16 %v402
        %v848 = vunpack.c.l.b16 %v403
        %v849 = vunpack.c.l.b16 %v404
        %v850 = vunpack.c.l.b16 %v405
        %v851 = vunpack.c.l.b16 %v406
        %v852 = vunpack.c.l.b16 %v407
        %v853 = vunpack.c.l.b16 %v408
        %v854 = vunpack.c.l.b16 %v409
        %v855 = vunpack.c.l.b16 %v410
        %v856 = vunpack.c.l.b16 %v411
        %v857 = vunpack.c.l.b16 %v412
        %v858 = vunpack.c.l.b16 %v413
        %v859 = vunpack.c.l.b16 %v414
        %v860 = vunpack.c.l.b16 %v415
        %v861 = vunpack.c.l.b16 %v416
        %v862 = vunpack.c.l.b16 %v417
        %v863 = vunpack.c.l.b16 %v418
        %v864 = vunpack.c.l.b16 %v419
        %v865 = vunpack.c.l.b16 %v420
        %v866 = vunpack.c.l.b16 %v421
        %v867 = vunpack.c.l.b16 %v422
        %v868 = vunpack.c.l.b16 %v423
        %v869 = vunpack.c.l.b16 %v424
        %v870 = vunpack.c.l.b16 %v425
        %v871 = vunpack.c.l.b16 %v426
        %v872 = vunpack.c.l.b16 %v427
        %v873 = vunpack.c.l.b16 %v428
        %v874 = vunpack.c.l.b16 %v429
        %v875 = vunpack.c.l.b16 %v430
        %v876 = vunpack.c.l.b16 %v431
        %v877 = vunpack.c.l.b16 %v432
        %v878 = vunpack.c.l.b16 %v433
        %v879 = vunpack.c.l.b16 %v434
        %v880 = vunpack.c.l.b16 %v435
        %v881 = vunpack.c.l.b16 %v436
        %v882 = vunpack.c.l.b16 %v437
        %v883 = vunpack.c.l.b16 %v438
        %v884 = vunpack.c.l.b16 %v439
        %v885 = vunpack.c.l.b16 %v440
        %v886 = vunpack.c.l.b16 %v441
        %v887 = vunpack.c.l.b16 %v442
        %v888 = vunpack.c.l.b16 %v443
        %v889 = vunpack.c.l.b16 %v444
        %v890 = vunpack.c.l.b16 %v445
        %v891 = vunpack.c.l.b16 %v446
        %v892 = vunpack.c.l.b16 %v447
        %v893 = vunpack.c.l.b16 %v448
        %v894 = vunpack.c.l.b16 %v449
        %v895 = vunpack.c.l.b16 %v450
        %v896 = vunpack.c.l.b16 %v451
        %v897 = vunpack.c.l.b16 %v452
        %v898 = vpack.c.b16 %v735, %v734
        %v899 = vpack.c.b16 %v737, %v736
        %v900 = vpack.c.b16 %v739, %v738
        %v901 = vpack.c.b16 %v741, %v740
        %v902 = vpack.c.b16 %v743, %v742
        %v903 = vpack.c.b16 %v745, %v744
        %v904 = vpack.c.b16 %v747, %v746
        %v905 = vpack.c.b16 %v749, %v748
        %v906 = vpack.c.b16 %v751, %v750
        %v907 = vpack.c.b16 %v753, %v752
        %v908 = vpack.c.b16 %v755, %v754
        %v909 = vpack.c.b16 %v757, %v756
        %v910 = vpack.c.b16 %v759, %v758
        %v911 = vpack.c.b16 %v761, %v760
        %v912 = vpack.c.b16 %v763, %v762
        %v913 = vpack.c.b16 %v765, %v764
        %v914 = vpack.c.b16 %v767, %v766
        %v915 = vpack.c.b16 %v769, %v768
        %v916 = vpack.c.b16 %v771, %v770
        %v917 = vpack.c.b16 %v773, %v772
        %v918 = vpack.c.b16 %v775, %v774
        %v919 = vpack.c.b16 %v777, %v776
        %v920 = vpack.c.b16 %v779, %v778
        %v921 = vpack.c.b16 %v781, %v780
        %v922 = vpack.c.b16 %v783, %v782
        %v923 = vpack.c.b16 %v785, %v784
        %v924 = vpack.c.b16 %v787, %v786
        %v925 = vpack.c.b16 %v789, %v788
        %v926 = vpack.c.b16 %v791, %v790
        %v927 = vpack.c.b16 %v793, %v792
        %v928 = vpack.c.b16 %v795, %v794
        %v929 = vpack.c.b16 %v797, %v796
        %v930 = vpack.c.b16 %v799, %v798
        %v931 = vpack.c.b16 %v801, %v800
        %v932 = vpack.c.b16 %v803, %v802
        %v933 = vpack.c.b16 %v805, %v804
        %v934 = vpack.c.b16 %v807, %v806
        %v935 = vpack.c.b16 %v809, %v808
        %v936 = vpack.c.b16 %v811, %v810
        %v937 = vpack.c.b16 %v813, %v812
        %v938 = vpack.c.b16 %v815, %v814
        %v939 = vpack.c.b16 %v817, %v816
        %v940 = vpack.c.b16 %v819, %v818
        %v941 = vpack.c.b16 %v821, %v820
        %v942 = vpack.c.b16 %v823, %v822
        %v943 = vpack.c.b16 %v825, %v824
        %v944 = vpack.c.b16 %v827, %v826
        %v945 = vpack.c.b16 %v829, %v828
        %v946 = vpack.c.b16 %v831, %v830
        %v947 = vpack.c.b16 %v833, %v832
        %v948 = vpack.c.b16 %v835, %v834
        %v949 = vpack.c.b16 %v837, %v836
        %v950 = vpack.c.b16 %v839, %v838
        %v951 = vpack.c.b16 %v841, %v840
        %v952 = vpack.c.b16 %v843, %v842
        %v953 = vpack.c.b16 %v845, %v844
        %v954 = vpack.c.b16 %v847, %v846
        %v955 = vpack.c.b16 %v849, %v848
        %v956 = vpack.c.b16 %v851, %v850
        %v957 = vpack.c.b16 %v853, %v852
        %v958 = vpack.c.b16 %v855, %v854
        %v959 = vpack.c.b16 %v857, %v856
        %v960 = vpack.c.b16 %v859, %v858
        %v961 = vpack.c.b16 %v861, %v860
        %v962 = vpack.c.b16 %v863, %v862
        %v963 = vpack.c.b16 %v865, %v864
        %v964 = vpack.c.b16 %v867, %v866
        %v965 = vpack.c.b16 %v869, %v868
        %v966 = vpack.c.b16 %v871, %v870
        %v967 = vpack.c.b16 %v873, %v872
        %v968 = vpack.c.b16 %v875, %v874
        %v969 = vpack.c.b16 %v877, %v876
        %v970 = vpack.c.b16 %v879, %v878
        %v971 = vpack.c.b16 %v881, %v880
        %v972 = vpack.c.b16 %v883, %v882
        %v973 = vpack.c.b16 %v885, %v884
        %v974 = vpack.c.b16 %v887, %v886
        %v975 = vpack.c.b16 %v889, %v888
        %v976 = vpack.c.b16 %v891, %v890
        %v977 = vpack.c.b16 %v893, %v892
        %v978 = vpack.c.b16 %v895, %v894
        %v979 = vpack.c.b16 %v897, %v896
        %vm1062 = vcmask 261120
        %v1064 = vsel %vm1062, %v538, 0
        %v1067 = vsel %vm1062, %v549, 0
        %1069 = vmatprep.subr.bf16.mxu0 0
        %1070 = vmatpush1.bf16.msra.mxu0 %v898
        %1071 = vmatprep.subr.bf16.mxu0 0
        %1072 = vmatpush1.bf16.msra.mxu0 %v899
        %1073 = vmatprep.subr.bf16.mxu0 0
        %1074 = vmatpush1.bf16.msra.mxu0 %v900
        %1075 = vmatprep.subr.bf16.mxu0 0
        %1076 = vmatpush1.bf16.msra.mxu0 %v901
        %1077 = vmatprep.subr.bf16.mxu0 0
        %1078 = vmatpush1.bf16.msra.mxu0 %v902
        %1079 = vmatprep.subr.bf16.mxu0 0
        %1080 = vmatpush1.bf16.msra.mxu0 %v903
        %1081 = vmatprep.subr.bf16.mxu0 0
        %1082 = vmatpush1.bf16.msra.mxu0 %v904
        %1083 = vmatprep.subr.bf16.mxu0 0
        %1084 = vmatpush1.bf16.msra.mxu0 %v905
        %1085 = vmatprep.subr.bf16.mxu0 0
        %1086 = vmatpush1.bf16.msra.mxu0 %v906
        %1087 = vmatprep.subr.bf16.mxu0 0
        %1088 = vmatpush1.bf16.msra.mxu0 %v907
        %1089 = vmatprep.subr.bf16.mxu0 0
        %1090 = vmatpush1.bf16.msra.mxu0 %v908
        %1091 = vmatprep.subr.bf16.mxu0 0
        %1092 = vmatpush1.bf16.msra.mxu0 %v909
        %1093 = vmatprep.subr.bf16.mxu0 0
        %1094 = vmatpush1.bf16.msra.mxu0 %v910
        %1095 = vmatprep.subr.bf16.mxu0 0
        %1096 = vmatpush1.bf16.msra.mxu0 %v911
        %1097 = vmatprep.subr.bf16.mxu0 0
        %1098 = vmatpush1.bf16.msra.mxu0 %v912
        %1099 = vmatprep.subr.bf16.mxu0 0
        %1100 = vmatpush1.bf16.msra.mxu0 %v913
        %1101 = vmatprep.mubr.bf16.mxu0 %v529
        %1102 = vmatmul.mubr.bf16.gmra.mrb[0].mxu0 %v528
        %v1103 = vpop.f32.mrb[0].mxu0
        %v1104 = vadd.f32 %v458, %v1103
        %v1105 = vpop.f32.mrb[0].mxu0
        %v1106 = vpop.f32.mrb[0].mxu0
        %v1107 = vadd.f32 %v458, %v1106
        %v1108 = vpop.f32.mrb[0].mxu0
        %1109 = vmatprep.mubr.bf16.mxu0 %v540
        %1110 = vmatmul.mubr.bf16.gmra.mrb[0].mxu0 %v539
        %v1111 = vpop.f32.mrb[0].mxu0
        %v1112 = vadd.f32 %v458, %v1111
        %v1113 = vpop.f32.mrb[0].mxu0
        %v1114 = vpop.f32.mrb[0].mxu0
        %v1115 = vadd.f32 %v458, %v1114
        %v1116 = vpop.f32.mrb[0].mxu0
        %1117 = vdwg.mxu0
        %1118 = vmatprep.subr.bf16.mxu0 0
        %1119 = vmatpush1.bf16.msra.mxu0 %v914
        %1120 = vmatprep.subr.bf16.mxu0 0
        %1121 = vmatpush1.bf16.msra.mxu0 %v915
        %1122 = vmatprep.subr.bf16.mxu0 0
        %1123 = vmatpush1.bf16.msra.mxu0 %v916
        %1124 = vmatprep.subr.bf16.mxu0 0
        %1125 = vmatpush1.bf16.msra.mxu0 %v917
        %1126 = vmatprep.subr.bf16.mxu0 0
        %1127 = vmatpush1.bf16.msra.mxu0 %v918
        %1128 = vmatprep.subr.bf16.mxu0 0
        %1129 = vmatpush1.bf16.msra.mxu0 %v919
        %1130 = vmatprep.subr.bf16.mxu0 0
        %1131 = vmatpush1.bf16.msra.mxu0 %v920
        %1132 = vmatprep.subr.bf16.mxu0 0
        %1133 = vmatpush1.bf16.msra.mxu0 %v921
        %1134 = vmatprep.subr.bf16.mxu0 0
        %1135 = vmatpush1.bf16.msra.mxu0 %v922
        %1136 = vmatprep.subr.bf16.mxu0 0
        %1137 = vmatpush1.bf16.msra.mxu0 %v923
        %1138 = vmatprep.subr.bf16.mxu0 0
        %1139 = vmatpush1.bf16.msra.mxu0 %v924
        %1140 = vmatprep.subr.bf16.mxu0 0
        %1141 = vmatpush1.bf16.msra.mxu0 %v925
        %1142 = vmatprep.subr.bf16.mxu0 0
        %1143 = vmatpush1.bf16.msra.mxu0 %v926
        %1144 = vmatprep.subr.bf16.mxu0 0
        %1145 = vmatpush1.bf16.msra.mxu0 %v927
        %1146 = vmatprep.subr.bf16.mxu0 0
        %1147 = vmatpush1.bf16.msra.mxu0 %v928
        %1148 = vmatprep.subr.bf16.mxu0 0
        %1149 = vmatpush1.bf16.msra.mxu0 %v929
        %1150 = vmatprep.mubr.bf16.mxu0 %v531
        %1151 = vmatmul.mubr.bf16.gmra.mrb[0].mxu0 %v530
        %v1152 = vpop.f32.mrb[0].mxu0
        %v1153 = vadd.f32 %v1104, %v1152
        %v1154 = vpop.f32.mrb[0].mxu0
        %v1155 = vpop.f32.mrb[0].mxu0
        %v1156 = vadd.f32 %v1107, %v1155
        %v1157 = vpop.f32.mrb[0].mxu0
        %1158 = vmatprep.mubr.bf16.mxu0 %v542
        %1159 = vmatmul.mubr.bf16.gmra.mrb[0].mxu0 %v541
        %v1160 = vpop.f32.mrb[0].mxu0
        %v1161 = vadd.f32 %v1112, %v1160
        %v1162 = vpop.f32.mrb[0].mxu0
        %v1163 = vpop.f32.mrb[0].mxu0
        %v1164 = vadd.f32 %v1115, %v1163
        %v1165 = vpop.f32.mrb[0].mxu0
        %1166 = vdwg.mxu0
        %1167 = vmatprep.subr.bf16.mxu0 0
        %1168 = vmatpush1.bf16.msra.mxu0 %v930
        %1169 = vmatprep.subr.bf16.mxu0 0
        %1170 = vmatpush1.bf16.msra.mxu0 %v931
        %1171 = vmatprep.subr.bf16.mxu0 0
        %1172 = vmatpush1.bf16.msra.mxu0 %v932
        %1173 = vmatprep.subr.bf16.mxu0 0
        %1174 = vmatpush1.bf16.msra.mxu0 %v933
        %1175 = vmatprep.subr.bf16.mxu0 0
        %1176 = vmatpush1.bf16.msra.mxu0 %v934
        %1177 = vmatprep.subr.bf16.mxu0 0
        %1178 = vmatpush1.bf16.msra.mxu0 %v935
        %1179 = vmatprep.subr.bf16.mxu0 0
        %1180 = vmatpush1.bf16.msra.mxu0 %v936
        %1181 = vmatprep.subr.bf16.mxu0 0
        %1182 = vmatpush1.bf16.msra.mxu0 %v937
        %1183 = vmatprep.subr.bf16.mxu0 0
        %1184 = vmatpush1.bf16.msra.mxu0 %v938
        %1185 = vmatprep.subr.bf16.mxu0 0
        %1186 = vmatpush1.bf16.msra.mxu0 %v939
        %1187 = vmatprep.subr.bf16.mxu0 0
        %1188 = vmatpush1.bf16.msra.mxu0 %v940
        %1189 = vmatprep.subr.bf16.mxu0 0
        %1190 = vmatpush1.bf16.msra.mxu0 %v941
        %1191 = vmatprep.subr.bf16.mxu0 0
        %1192 = vmatpush1.bf16.msra.mxu0 %v942
        %1193 = vmatprep.subr.bf16.mxu0 0
        %1194 = vmatpush1.bf16.msra.mxu0 %v943
        %1195 = vmatprep.subr.bf16.mxu0 0
        %1196 = vmatpush1.bf16.msra.mxu0 %v944
        %1197 = vmatprep.subr.bf16.mxu0 0
        %1198 = vmatpush1.bf16.msra.mxu0 %v945
        %1199 = vmatprep.mubr.bf16.mxu0 %v533
        %1200 = vmatmul.mubr.bf16.gmra.mrb[0].mxu0 %v532
        %v1201 = vpop.f32.mrb[0].mxu0
        %v1202 = vadd.f32 %v1153, %v1201
        %v1203 = vpop.f32.mrb[0].mxu0
        %v1204 = vpop.f32.mrb[0].mxu0
        %v1205 = vadd.f32 %v1156, %v1204
        %v1206 = vpop.f32.mrb[0].mxu0
        %1207 = vmatprep.mubr.bf16.mxu0 %v544
        %1208 = vmatmul.mubr.bf16.gmra.mrb[0].mxu0 %v543
        %v1209 = vpop.f32.mrb[0].mxu0
        %v1210 = vadd.f32 %v1161, %v1209
        %v1211 = vpop.f32.mrb[0].mxu0
        %v1212 = vpop.f32.mrb[0].mxu0
        %v1213 = vadd.f32 %v1164, %v1212
        %v1214 = vpop.f32.mrb[0].mxu0
        %1215 = vdwg.mxu0
        %1216 = vmatprep.subr.bf16.mxu0 0
        %1217 = vmatpush1.bf16.msra.mxu0 %v946
        %1218 = vmatprep.subr.bf16.mxu0 0
        %1219 = vmatpush1.bf16.msra.mxu0 %v947
        %1220 = vmatprep.subr.bf16.mxu0 0
        %1221 = vmatpush1.bf16.msra.mxu0 %v948
        %1222 = vmatprep.subr.bf16.mxu0 0
        %1223 = vmatpush1.bf16.msra.mxu0 %v949
        %1224 = vmatprep.subr.bf16.mxu0 0
        %1225 = vmatpush1.bf16.msra.mxu0 %v950
        %1226 = vmatprep.subr.bf16.mxu0 0
        %1227 = vmatpush1.bf16.msra.mxu0 %v951
        %1228 = vmatprep.subr.bf16.mxu0 0
        %1229 = vmatpush1.bf16.msra.mxu0 %v952
        %1230 = vmatprep.subr.bf16.mxu0 0
        %1231 = vmatpush1.bf16.msra.mxu0 %v953
        %1232 = vmatprep.subr.bf16.mxu0 0
        %1233 = vmatpush1.bf16.msra.mxu0 %v954
        %1234 = vmatprep.subr.bf16.mxu0 0
        %1235 = vmatpush1.bf16.msra.mxu0 %v955
        %1236 = vmatprep.subr.bf16.mxu0 0
        %1237 = vmatpush1.bf16.msra.mxu0 %v956
        %1238 = vmatprep.subr.bf16.mxu0 0
        %1239 = vmatpush1.bf16.msra.mxu0 %v957
        %1240 = vmatprep.subr.bf16.mxu0 0
        %1241 = vmatpush1.bf16.msra.mxu0 %v958
        %1242 = vmatprep.subr.bf16.mxu0 0
        %1243 = vmatpush1.bf16.msra.mxu0 %v959
        %1244 = vmatprep.subr.bf16.mxu0 0
        %1245 = vmatpush1.bf16.msra.mxu0 %v960
        %1246 = vmatprep.subr.bf16.mxu0 0
        %1247 = vmatpush1.bf16.msra.mxu0 %v961
        %1248 = vmatprep.mubr.bf16.mxu0 %v535
        %1249 = vmatmul.mubr.bf16.gmra.mrb[0].mxu0 %v534
        %v1250 = vpop.f32.mrb[0].mxu0
        %v1251 = vadd.f32 %v1202, %v1250
        %v1252 = vpop.f32.mrb[0].mxu0
        %v1253 = vpop.f32.mrb[0].mxu0
        %v1254 = vadd.f32 %v1205, %v1253
        %v1255 = vpop.f32.mrb[0].mxu0
        %1256 = vmatprep.mubr.bf16.mxu0 %v546
        %1257 = vmatmul.mubr.bf16.gmra.mrb[0].mxu0 %v545
        %v1258 = vpop.f32.mrb[0].mxu0
        %v1259 = vadd.f32 %v1210, %v1258
        %v1260 = vpop.f32.mrb[0].mxu0
        %v1261 = vpop.f32.mrb[0].mxu0
        %v1262 = vadd.f32 %v1213, %v1261
        %v1263 = vpop.f32.mrb[0].mxu0
        %1264 = vdwg.mxu0
        %1265 = vmatprep.subr.bf16.mxu0 0
        %1266 = vmatpush1.bf16.msra.mxu0 %v962
        %1267 = vmatprep.subr.bf16.mxu0 0
        %1268 = vmatpush1.bf16.msra.mxu0 %v963
        %1269 = vmatprep.subr.bf16.mxu0 0
        %1270 = vmatpush1.bf16.msra.mxu0 %v964
        %1271 = vmatprep.subr.bf16.mxu0 0
        %1272 = vmatpush1.bf16.msra.mxu0 %v965
        %1273 = vmatprep.subr.bf16.mxu0 0
        %1274 = vmatpush1.bf16.msra.mxu0 %v966
        %1275 = vmatprep.subr.bf16.mxu0 0
        %1276 = vmatpush1.bf16.msra.mxu0 %v967
        %1277 = vmatprep.subr.bf16.mxu0 0
        %1278 = vmatpush1.bf16.msra.mxu0 %v968
        %1279 = vmatprep.subr.bf16.mxu0 0
        %1280 = vmatpush1.bf16.msra.mxu0 %v969
        %1281 = vmatprep.subr.bf16.mxu0 0
        %1282 = vmatpush1.bf16.msra.mxu0 %v970
        %1283 = vmatprep.subr.bf16.mxu0 0
        %1284 = vmatpush1.bf16.msra.mxu0 %v971
        %1285 = vmatprep.subr.bf16.mxu0 0
        %1286 = vmatpush1.bf16.msra.mxu0 %v972
        %1287 = vmatprep.subr.bf16.mxu0 0
        %1288 = vmatpush1.bf16.msra.mxu0 %v973
        %1289 = vmatprep.subr.bf16.mxu0 0
        %1290 = vmatpush1.bf16.msra.mxu0 %v974
        %1291 = vmatprep.subr.bf16.mxu0 0
        %1292 = vmatpush1.bf16.msra.mxu0 %v975
        %1293 = vmatprep.subr.bf16.mxu0 0
        %1294 = vmatpush1.bf16.msra.mxu0 %v976
        %1295 = vmatprep.subr.bf16.mxu0 0
        %1296 = vmatpush1.bf16.msra.mxu0 %v977
        %1297 = vmatprep.mubr.bf16.mxu0 %v537
        %1298 = vmatmul.mubr.bf16.gmra.mrb[0].mxu0 %v536
        %v1299 = vpop.f32.mrb[0].mxu0
        %v1300 = vadd.f32 %v1251, %v1299
        %v1301 = vpop.f32.mrb[0].mxu0
        %v1302 = vpop.f32.mrb[0].mxu0
        %v1303 = vadd.f32 %v1254, %v1302
        %v1304 = vpop.f32.mrb[0].mxu0
        %1305 = vmatprep.mubr.bf16.mxu0 %v548
        %1306 = vmatmul.mubr.bf16.gmra.mrb[0].mxu0 %v547
        %v1307 = vpop.f32.mrb[0].mxu0
        %v1308 = vadd.f32 %v1259, %v1307
        %v1309 = vpop.f32.mrb[0].mxu0
        %v1310 = vpop.f32.mrb[0].mxu0
        %v1311 = vadd.f32 %v1262, %v1310
        %v1312 = vpop.f32.mrb[0].mxu0
        %1313 = vdwg.mxu0
        %1314 = vmatprep.subr.bf16.mxu0 0
        %1315 = vmatpush1.bf16.msra.mxu0 %v978
        %1316 = vmatprep.subr.bf16.mxu0 0
        %1317 = vmatpush1.bf16.msra.mxu0 %v979
        %1318 = vmatprep.subr.bf16.mxu0 0
        %1319 = vmatpush1.bf16.msra.mxu0 0
        %1320 = vmatprep.subr.bf16.mxu0 0
        %1321 = vmatpush1.bf16.msra.mxu0 0
        %1322 = vmatprep.subr.bf16.mxu0 0
        %1323 = vmatpush1.bf16.msra.mxu0 0
        %1324 = vmatprep.subr.bf16.mxu0 0
        %1325 = vmatpush1.bf16.msra.mxu0 0
        %1326 = vmatprep.subr.bf16.mxu0 0
        %1327 = vmatpush1.bf16.msra.mxu0 0
        %1328 = vmatprep.subr.bf16.mxu0 0
        %1329 = vmatpush1.bf16.msra.mxu0 0
        %1330 = vmatprep.subr.bf16.mxu0 0
        %1331 = vmatpush1.bf16.msra.mxu0 0
        %1332 = vmatprep.subr.bf16.mxu0 0
        %1333 = vmatpush1.bf16.msra.mxu0 0
        %1334 = vmatprep.subr.bf16.mxu0 0
        %1335 = vmatpush1.bf16.msra.mxu0 0
        %1336 = vmatprep.subr.bf16.mxu0 0
        %1337 = vmatpush1.bf16.msra.mxu0 0
        %1338 = vmatprep.subr.bf16.mxu0 0
        %1339 = vmatpush1.bf16.msra.mxu0 0
        %1340 = vmatprep.subr.bf16.mxu0 0
        %1341 = vmatpush1.bf16.msra.mxu0 0
        %1342 = vmatprep.subr.bf16.mxu0 0
        %1343 = vmatpush1.bf16.msra.mxu0 0
        %1344 = vmatprep.subr.bf16.mxu0 0
        %1345 = vmatpush1.bf16.msra.mxu0 0
        %1346 = vmatprep.mubr.bf16.mxu0 0
        %1347 = vmatmul.mubr.bf16.gmra.mrb[0].mxu0 %v1064
        %v1348 = vpop.f32.mrb[0].mxu0
        %v1349 = vadd.f32 %v1300, %v1348
        %v1350 = vpop.f32.mrb[0].mxu0
        %v1351 = vpop.f32.mrb[0].mxu0
        %v1352 = vadd.f32 %v1303, %v1351
        %v1353 = vpop.f32.mrb[0].mxu0
        %1354 = vmatprep.mubr.bf16.mxu0 0
        %1355 = vmatmul.mubr.bf16.gmra.mrb[0].mxu0 %v1067
        %v1356 = vpop.f32.mrb[0].mxu0
        %v1357 = vadd.f32 %v1308, %v1356
        %v1358 = vpop.f32.mrb[0].mxu0
        %v1359 = vpop.f32.mrb[0].mxu0
        %v1360 = vadd.f32 %v1311, %v1359
        %v1361 = vpop.f32.mrb[0].mxu0
        %1362 = vdwg.mxu0
        %1363 = vst [vmem:[%s258] sm:$0xff] %v1349
        %1364 = vst [vmem:[%s258 + $0x8] sm:$0xff] %v1352
        %1365 = vst [vmem:[%s258 + $0x10] sm:$0xff] %v1357
        %1366 = vst [vmem:[%s258 + $0x18] sm:$0xff] %v1360
        %s1367 = sand.u32 %s125, 1
        %s1368 = scalar_lea.sflag [#allocation4], %s1367
        %s1369 = sand.u32 %s125, 1
        %s1370 = smul.addr %s1369, 32
        %s1371 = scalar_lea.vmem [#allocation7], %s1370
        // Predicated region
        $region41: #{tpu_custom_call.1} parent=31 // pred_check
          %p1372 = pneg %p135
        $region42: #{tpu_custom_call.1} parent=31 // pred_check_branch
          %1374 = sbr.rel (%p1372) target = $region44
        $region43: #{tpu_custom_call.1} parent=31 // pred_region
          %s1375 = smul.u32 4, %s28
          %s1377 = ssub.s32 512, 512
          %1378 = vsyncadd %s1368, %s1377
          %s1379 = smul.addr %s1375, 2
          %s1380 = sadd.s32 %s27, %s1379
          %s1381 = smul.addr %s1380, 128
          %s1382 = scalar_lea.hbm %s3, %s1381
          %s1383 = sshll.u32 %s1371, 4
          %s1384 = int_to_ptr.vmem [resolvable:$true] %s1383
          %1389 = dma.vmem_to_hbm [thread:$0]  %s1384, 512, %s1382, %s1368, 128, 256, 8
        $region44: #{tpu_custom_call.1} parent=31 // pred_fallthru
          _
      $region32: #{tpu_custom_call.1} parent=5 // pred_fallthru
        _
      %p1390 = scmp.le.s32.totalorder 2, %s18
      // Predicated region
      $region45: #{tpu_custom_call.1} parent=5 // pred_check
        %p1391 = pneg %p1390
      $region46: #{tpu_custom_call.1} parent=5 // pred_check_branch
        %1393 = sbr.rel (%p1391) target = $region48
      $region47: #{tpu_custom_call.1} parent=5 // pred_region
        %s1394 = ssub.s32 %s18, 2
        // Predicated region
        $region49: #{tpu_custom_call.1} parent=47 // pred_check
          %p1395 = pneg %p141
        $region50: #{tpu_custom_call.1} parent=47 // pred_check_branch
          %1397 = sbr.rel (%p1395) target = $region52
        $region51: #{tpu_custom_call.1} parent=47 // pred_region
          %s1398 = sand.u32 %s126, 1
          %s1399 = scalar_lea.sflag [#allocation4], %s1398
          %s1400 = sand.u32 %s126, 1
          %s1401 = smul.addr %s1400, 32
          %s1402 = scalar_lea.vmem [#allocation7], %s1401
          %1403 = dma.done %s1399, 512
        $region52: #{tpu_custom_call.1} parent=47 // pred_fallthru
          _
      $region48: #{tpu_custom_call.1} parent=5 // pred_fallthru
        _
    $region6: #{tpu_custom_call.1} parent=1 // loop_footer
      %s22 = sadd.s32 1, %s18
    $region7: #{tpu_custom_call.1} parent=1 // loop_footer_branch
      %17 = sbr.rel target = $region3
    $region8: #{tpu_custom_call.1} parent=1 // loop_exit
      _
    %1404 = vsyncpa [#allocation3], 1
    %s1405 = scalar_lea.sflag [#allocation3], 1
    %1406 = vsyncpa %s1405, 1
    %1407 = vsyncpa [#allocation6], 1
    %s1408 = scalar_lea.sflag [#allocation6], 1
    %1409 = vsyncpa %s1408, 1
    %1410 = vsyncpa [#allocation4], 1
    %s1411 = scalar_lea.sflag [#allocation4], 1
    %1412 = vsyncpa %s1411, 1

</llo_original>
